<compile_context>
chip_gen: v7x
topology: tpu7x:2x2x1
jax: 0.10.0
libtpu: 0.0.40
codegen_flags: <defaults>
</compile_context>

<pallas_src>
import jax
import jax.numpy as jnp
from jax.experimental import pallas as pl
from jax.experimental.pallas import tpu as pltpu


def _round_up(a: int, b: int) -> int:
    return ((a + b - 1) // b) * b


def _cdiv(a: int, b: int) -> int:
    return (a + b - 1) // b


def poly_wrapper_kernel(x_ref, w_ref, b_ref, o_ref):
    # x_ref: (tm, Din)   w_ref: (Din, tn) = (Wm.T @ basis) tile
    # b_ref: (1, tn)     o_ref: (tm, tn)
    acc = jnp.dot(x_ref[...], w_ref[...], preferred_element_type=jnp.float32)
    o_ref[...] = (acc + b_ref[...]).astype(o_ref.dtype)


def _vmem_limit_bytes(tm, tn, d_in, itemsize=4):
    # (8,128)-padded footprint; every operand/output is double-buffered by the
    # auto-pipeline (multiplicity counted once — no extra safety factor).
    def tile(r, c):
        return _round_up(r, 8) * _round_up(c, 128) * itemsize

    need = 2 * (tile(tm, d_in)     # x tile
                + tile(d_in, tn)   # W_eff tile
                + tile(1, tn)      # b_eff tile
                + tile(tm, tn))    # output tile
    # ~25% headroom for compiler scratch; cap safe for v7x (64 MiB VMEM per TC).
    return int(min(max(int(need * 1.25), 4 << 20), 40 << 20))


def make_poly_basis(output_dim, output_size, orders=None):
    """range_[i, s] = (s / output_size) ** order_i  (mirrors PyTorch __init__)."""
    xs = jnp.arange(output_size, dtype=jnp.float32) / output_size
    if orders is None:
        orders = list(range(output_dim))
    return jnp.stack([jnp.power(xs, jnp.float32(o)) for o in orders], axis=0)


def polynomial_model_forward(x, wm, bm, basis, *, tile_m=512, tile_n=512):
    """x: [B, Din]; wm: [K, Din] (torch Linear weight); bm: [K]; basis: [K, S]."""
    m, d_in = x.shape
    k, s = basis.shape
    assert wm.shape == (k, d_in) and bm.shape == (k,)

    # Fold the Linear inner model with the polynomial basis (batch-independent):
    #   out = (x @ Wm.T + bm) @ basis == x @ (Wm.T @ basis) + (bm @ basis)
    w_eff = jnp.dot(wm.T, basis, preferred_element_type=jnp.float32)        # [Din, S]
    b_eff = jnp.dot(bm, basis, preferred_element_type=jnp.float32).reshape(1, s)

    # Tile selection: full dim when it fits (always layout-legal), otherwise an
    # aligned tile; ragged last blocks are handled by the cdiv grid (no padding
    # passes over HBM).
    tile_m = max(8, (tile_m // 8) * 8)
    tile_n = max(128, (tile_n // 128) * 128)
    tm = m if m <= tile_m else tile_m          # multiple of 8, or the full M dim
    tn = s if s <= tile_n else tile_n          # multiple of 128, or the full S dim

    gm, gn = _cdiv(m, tm), _cdiv(s, tn)
    # Keep >= 2 parallel grid steps when S allows, so v7x's two TensorCores
    # both get work even at small batch.
    if gm * gn == 1 and s % 128 == 0 and s > 128:
        tn = 128 * max(1, (s // 128) // 2)
        gn = _cdiv(s, tn)

    cost = pl.CostEstimate(
        flops=2 * m * d_in * s + m * s,
        transcendentals=0,
        # x re-read per column tile, W_eff/b_eff re-read per row tile.
        bytes_accessed=4 * (gn * m * d_in + gm * d_in * s + gm * s + m * s),
    )

    out = pl.pallas_call(
        poly_wrapper_kernel,
        out_shape=jax.ShapeDtypeStruct((m, s), x.dtype),
        grid_spec=pltpu.PrefetchScalarGridSpec(
            num_scalar_prefetch=0,
            grid=(gm, gn),
            in_specs=[
                pl.BlockSpec((tm, d_in), lambda i, j: (i, 0)),   # x rows
                pl.BlockSpec((d_in, tn), lambda i, j: (0, j)),   # W_eff columns
                pl.BlockSpec((1, tn), lambda i, j: (0, j)),      # b_eff columns
            ],
            out_specs=pl.BlockSpec((tm, tn), lambda i, j: (i, j)),
        ),
        compiler_params=pltpu.CompilerParams(
            dimension_semantics=("parallel", "parallel"),
            vmem_limit_bytes=_vmem_limit_bytes(tm, tn, d_in),
        ),
        cost_estimate=cost,
    )(x, w_eff, b_eff)

    return out


if __name__ == "__main__":
    key = jax.random.PRNGKey(0)
    k_x, k_w, k_b = jax.random.split(key, 3)

    batch, in_features = 4, 32
    output_dim, output_size = 4, 256        # K polynomial orders, S output samples

    x = jax.random.normal(k_x, (batch, in_features), dtype=jnp.float32)
    # Deterministic torch-like Linear(in_features, output_dim) params.
    bound = 1.0 / (in_features ** 0.5)
    wm = jax.random.uniform(k_w, (output_dim, in_features),
                            minval=-bound, maxval=bound, dtype=jnp.float32)
    bm = jax.random.uniform(k_b, (output_dim,),
                            minval=-bound, maxval=bound, dtype=jnp.float32)

    basis = make_poly_basis(output_dim, output_size)    # orders default to 0..K-1

    out = polynomial_model_forward(x, wm, bm, basis)
    out = jax.block_until_ready(out)

    # Reference (mirrors the PyTorch forward loop exactly).
    c = x @ wm.T + bm
    ref = jnp.zeros((batch, output_size), jnp.float32)
    for i in range(output_dim):
        ref = ref + c[:, i, None] * basis[i][None, :]

    assert out.shape == (batch, output_size)
    assert jnp.allclose(out, ref, atol=1e-4, rtol=1e-4)
    print("KERNEL_OK")
</pallas_src>

<mosaic_0001>
module attributes {stable_mosaic.version = 11 : i64} {
  func.func @poly_wrapper_kernel(%arg0: i32, %arg1: i32, %arg2: memref<4x32xf32, #tpu.memory_space<vmem>>, %arg3: memref<32x128xf32, #tpu.memory_space<vmem>>, %arg4: memref<1x128xf32, #tpu.memory_space<vmem>>, %arg5: memref<4x128xf32, #tpu.memory_space<vmem>>) attributes {dimension_semantics = [#tpu.dimension_semantics<parallel>, #tpu.dimension_semantics<parallel>], iteration_bounds = array<i64: 1, 2>, scalar_prefetch = 0 : i64, scratch_operands = 0 : i64, tpu.core_type = #tpu.core_type<tc>, window_params = [{transform_indices = @transform_0, window_bounds = array<i64: 4, 32>}, {transform_indices = @transform_1, window_bounds = array<i64: 32, 128>}, {transform_indices = @transform_2, window_bounds = array<i64: 1, 128>}, {transform_indices = @transform_3, window_bounds = array<i64: 4, 128>}]} {
    %c0 = arith.constant 0 : index
    %c0_0 = arith.constant 0 : index
    %0 = vector.load %arg2[%c0, %c0_0] : memref<4x32xf32, #tpu.memory_space<vmem>>, vector<4x32xf32>
    %c0_1 = arith.constant 0 : index
    %c0_2 = arith.constant 0 : index
    %1 = vector.load %arg3[%c0_1, %c0_2] : memref<32x128xf32, #tpu.memory_space<vmem>>, vector<32x128xf32>
    %cst = arith.constant dense<0.000000e+00> : vector<4x128xf32>
    %2 = tpu.matmul %0, %1, %cst {dimension_numbers = #tpu.dot_dimension_numbers<[1], [0], [0], [1], [0, 0, 1, 1], [], []>} : vector<4x32xf32>, vector<32x128xf32>, vector<4x128xf32> -> vector<4x128xf32>
    %c0_3 = arith.constant 0 : index
    %c0_4 = arith.constant 0 : index
    %3 = vector.load %arg4[%c0_3, %c0_4] : memref<1x128xf32, #tpu.memory_space<vmem>>, vector<1x128xf32>
    %4 = vector.broadcast %3 : vector<1x128xf32> to vector<4x128xf32>
    %5 = arith.addf %2, %4 : vector<4x128xf32>
    %c0_5 = arith.constant 0 : index
    %c0_6 = arith.constant 0 : index
    %6 = vector.load %arg5[%c0_5, %c0_6] : memref<4x128xf32, #tpu.memory_space<vmem>>, vector<4x128xf32>
    tpu.vector_store %arg5[%c0_5, %c0_6], %5 {strides = array<i32>} : memref<4x128xf32, #tpu.memory_space<vmem>>, vector<4x128xf32>,
    return
  }
  func.func @transform_0(%arg0: i32, %arg1: i32) -> (i32, i32) {
    %c0_i32 = arith.constant 0 : i32
    %c0_i32_0 = arith.constant 0 : i32
    return %arg0, %c0_i32 : i32, i32
  }
  func.func @transform_1(%arg0: i32, %arg1: i32) -> (i32, i32) {
    %c0_i32 = arith.constant 0 : i32
    %c0_i32_0 = arith.constant 0 : i32
    return %c0_i32, %arg1 : i32, i32
  }
  func.func @transform_2(%arg0: i32, %arg1: i32) -> (i32, i32) {
    %c0_i32 = arith.constant 0 : i32
    %c0_i32_0 = arith.constant 0 : i32
    return %c0_i32, %arg1 : i32, i32
  }
  func.func @transform_3(%arg0: i32, %arg1: i32) -> (i32, i32) {
    %c0_i32 = arith.constant 0 : i32
    return %arg0, %arg1 : i32, i32
  }
}

</mosaic_0001>

<llo_original>
// kernel: tpu_custom_call.1
$region0: #{tpu_custom_call.1}
  #allocation0 [shape = 'u32[]', space=smem, size = 0x4, offset = 0x4, fixed_abs, tag = 'smem constant byte address 0x4 - core index']
  #allocation1 [shape = 'u32[144,128]{1,0:T(1,128)}', space=vmem, size = 0x12000, scoped, tag = 'internal scratch']
  %s0 = inlined_call_operand.hbm [shape: f32[4,32], index: 0, kind: input, shape index: {}]
  %s1 = inlined_call_operand.hbm [shape: f32[32,256], index: 1, kind: input, shape index: {}]
  %s2 = inlined_call_operand.vmem [shape: f32[1,256], index: 2, kind: input, shape index: {}]
  %s3 = inlined_call_operand.hbm [shape: f32[4,256], index: 3, kind: output, shape index: {}]
  %s4 = sld [smem:[#allocation0]]
  $region53: #{tpu_custom_call.1} parent=0
    _
  %s6 = ssub.s32 1, %s4
  %s7 = scalar_select 0, %s6, %s4
  $region1: #{tpu_custom_call.1} parent=0
    #allocation2 [shape = 'u8[2048]{0}', space=vmem, size = 0x800, scoped, tag = 'input window, operand 0, single buffered']
    #allocation3 [shape = 's32[2]{0}', space=sflag, size = 0x8, scoped, tag = 'scoped memory for tpu_custom_call.1']
    #allocation4 [shape = 's32[2]{0}', space=sflag, size = 0x8, scoped, tag = 'scoped memory for tpu_custom_call.1']
    #allocation5 [shape = 'u8[32768]{0}', space=vmem, size = 0x8000, scoped, tag = 'input window, operand 1']
    #allocation6 [shape = 's32[2]{0}', space=sflag, size = 0x8, scoped, tag = 'scoped memory for tpu_custom_call.1']
    #allocation7 [shape = 'u8[4096]{0}', space=vmem, size = 0x1000, scoped, tag = 'output window, operand 0']
    %8 = vsyncpa [#allocation3], 0
    %9 = vsyncpa [#allocation6], 0
    %s10 = scalar_lea.sflag [#allocation6], 1
    %11 = vsyncpa %s10, 0
    %12 = vsyncpa [#allocation4], 0
    %s13 = scalar_lea.sflag [#allocation4], 1
    %14 = vsyncpa %s13, 0
    loop: start=0, step=1, limit=4
    $region2: #{tpu_custom_call.1} parent=1 // loop_pre_header
      _
    $region3: #{tpu_custom_call.1} parent=1 // loop_header
      %s16 = sphi 0, %s20
      %p17 = scmp.ge.s32.totalorder %s16, 4
      %s23 = sphi 0, %s35
      %s24 = sphi 0, %s31
      %s25 = sphi 0, %s23
      %s26 = sphi 0, %s24
      %s27 = sphi 0, %s25
      %s28 = sphi 0, %s26
      %s38 = sphi 0, %s40
      %s41 = sphi 0, %s38
      %s42 = sphi 0, %s41
      %s58 = sphi 0, %s42
      %s64 = sphi 0, %s66
      %s67 = sphi 0, %s64
      %s68 = sphi 0, %s67
      %s84 = sphi 0, %s68
      %s90 = sphi 0, %s92
      %s93 = sphi 0, %s90
      %s94 = sphi 0, %s93
      %s110 = sphi 0, %s94
      %s118 = sphi 0, %s120
      %s121 = sphi 0, %s118
      %s122 = sphi 0, %s121
      %s138 = sphi 0, %s122
    $region4: #{tpu_custom_call.1} parent=1 // loop_header_branch
      %19 = sbr.rel (%p17) target = $region8
    $region5: #{tpu_custom_call.1} parent=1 // loop_body
      %s21 = ssub.s32 %s16, 1
      %s22 = ssub.s32 %s16, 2
      %s29 = sadd.s32 1, %s24
      %p30 = scmp.ge.s32.totalorder %s29, 2
      %s31 = scalar_select %p30, 0, %s29
      %s32 = sadd.s32 1, %s23
      %s33 = scalar_select %p30, %s32, %s23
      %p34 = scmp.ge.s32.totalorder %s33, 1
      %s35 = scalar_select %p34, 0, %s33
      %s36 = ssub.s32 %s23, %s35
      %p37 = scmp.eq.s32.totalorder %s36, 0
      %s39 = sadd.s32 %s38, 1
      %s40 = scalar_select %p37, %s38, %s39
      %p43 = pneg %p37
      %p44 = scmp.eq.s32.totalorder %s16, 1
      %p45 = por %p43, %p44
      %p46 = scmp.ne.s32.totalorder %s38, %s41
      %p47 = scmp.eq.s32.totalorder %s16, 0
      %p48 = por %p46, %p47
      %p49 = scmp.ne.s32.totalorder %s38, %s41
      %p50 = scmp.eq.s32.totalorder %s21, 1
      %p51 = por %p49, %p50
      %p52 = scmp.ne.s32.totalorder %s41, %s42
      %p53 = scmp.eq.s32.totalorder %s21, 0
      %p54 = por %p52, %p53
      %p55 = scmp.ne.s32.totalorder %s41, %s42
      %p56 = scmp.eq.s32.totalorder %s22, 1
      %p57 = por %p55, %p56
      %p59 = scmp.ne.s32.totalorder %s42, %s58
      %p60 = scmp.eq.s32.totalorder %s22, 0
      %p61 = por %p59, %p60
      %s62 = ssub.s32 %s24, %s31
      %p63 = scmp.eq.s32.totalorder %s62, 0
      %s65 = sadd.s32 %s64, 1
      %s66 = scalar_select %p63, %s64, %s65
      %p69 = pneg %p63
      %p70 = scmp.eq.s32.totalorder %s16, 1
      %p71 = por %p69, %p70
      %p72 = scmp.ne.s32.totalorder %s64, %s67
      %p73 = scmp.eq.s32.totalorder %s16, 0
      %p74 = por %p72, %p73
      %p75 = scmp.ne.s32.totalorder %s64, %s67
      %p76 = scmp.eq.s32.totalorder %s21, 1
      %p77 = por %p75, %p76
      %p78 = scmp.ne.s32.totalorder %s67, %s68
      %p79 = scmp.eq.s32.totalorder %s21, 0
      %p80 = por %p78, %p79
      %p81 = scmp.ne.s32.totalorder %s67, %s68
      %p82 = scmp.eq.s32.totalorder %s22, 1
      %p83 = por %p81, %p82
      %p85 = scmp.ne.s32.totalorder %s68, %s84
      %p86 = scmp.eq.s32.totalorder %s22, 0
      %p87 = por %p85, %p86
      %s88 = ssub.s32 %s24, %s31
      %p89 = scmp.eq.s32.totalorder %s88, 0
      %s91 = sadd.s32 %s90, 1
      %s92 = scalar_select %p89, %s90, %s91
      %p95 = pneg %p89
      %p96 = scmp.eq.s32.totalorder %s16, 1
      %p97 = por %p95, %p96
      %p98 = scmp.ne.s32.totalorder %s90, %s93
      %p99 = scmp.eq.s32.totalorder %s16, 0
      %p100 = por %p98, %p99
      %p101 = scmp.ne.s32.totalorder %s90, %s93
      %p102 = scmp.eq.s32.totalorder %s21, 1
      %p103 = por %p101, %p102
      %p104 = scmp.ne.s32.totalorder %s93, %s94
      %p105 = scmp.eq.s32.totalorder %s21, 0
      %p106 = por %p104, %p105
      %p107 = scmp.ne.s32.totalorder %s93, %s94
      %p108 = scmp.eq.s32.totalorder %s22, 1
      %p109 = por %p107, %p108
      %p111 = scmp.ne.s32.totalorder %s94, %s110
      %p112 = scmp.eq.s32.totalorder %s22, 0
      %p113 = por %p111, %p112
      %s114 = ssub.s32 %s23, %s35
      %s115 = ssub.s32 %s24, %s31
      %s116 = sor.u32 %s114, %s115
      %p117 = scmp.eq.s32.totalorder %s116, 0
      %s119 = sadd.s32 %s118, 1
      %s120 = scalar_select %p117, %s118, %s119
      %p123 = pneg %p117
      %p124 = scmp.eq.s32.totalorder %s16, 1
      %p125 = por %p123, %p124
      %p126 = scmp.ne.s32.totalorder %s118, %s121
      %p127 = scmp.eq.s32.totalorder %s16, 0
      %p128 = por %p126, %p127
      %p129 = scmp.ne.s32.totalorder %s118, %s121
      %p130 = scmp.eq.s32.totalorder %s21, 1
      %p131 = por %p129, %p130
      %p132 = scmp.ne.s32.totalorder %s121, %s122
      %p133 = scmp.eq.s32.totalorder %s21, 0
      %p134 = por %p132, %p133
      %p135 = scmp.ne.s32.totalorder %s121, %s122
      %p136 = scmp.eq.s32.totalorder %s22, 1
      %p137 = por %p135, %p136
      %p139 = scmp.ne.s32.totalorder %s122, %s138
      %p140 = scmp.eq.s32.totalorder %s22, 0
      %p141 = por %p139, %p140
      %p142 = scmp.le.s32.totalorder 1, %s16
      %p143 = scmp.lt.s32.totalorder %s16, 3
      %p144 = pnand %p142, %p143
      %p145 = pneg %p144
      // Predicated region
      $region9: #{tpu_custom_call.1} parent=5 // pred_check
        _
      $region10: #{tpu_custom_call.1} parent=5 // pred_check_branch
        %147 = sbr.rel (%p144) target = $region12
      $region11: #{tpu_custom_call.1} parent=5 // pred_region
        %s148 = ssub.s32 %s16, 1
        // Predicated region
        $region13: #{tpu_custom_call.1} parent=11 // pred_check
          %p149 = pneg %p54
        $region14: #{tpu_custom_call.1} parent=11 // pred_check_branch
          %151 = sbr.rel (%p149) target = $region16
        $region15: #{tpu_custom_call.1} parent=11 // pred_region
          %s153 = ssub.s32 64, 64
          %154 = vsyncadd [#allocation3], %s153
          %s155 = smul.addr %s25, 64
          %s156 = scalar_lea.hbm %s0, %s155
          %s158 = sshll.u32 [#allocation2], 4
          %s159 = int_to_ptr.vmem [resolvable:$true] %s158
          %161 = dma.hbm_to_vmem [thread:$0]  %s156, 64, %s159, [#allocation3]
        $region16: #{tpu_custom_call.1} parent=11 // pred_fallthru
          _
      $region12: #{tpu_custom_call.1} parent=5 // pred_fallthru
        _
      %p162 = scmp.lt.s32.totalorder %s16, 2
      // Predicated region
      $region17: #{tpu_custom_call.1} parent=5 // pred_check
        %p163 = pneg %p162
      $region18: #{tpu_custom_call.1} parent=5 // pred_check_branch
        %165 = sbr.rel (%p163) target = $region20
      $region19: #{tpu_custom_call.1} parent=5 // pred_region
        // Predicated region
        $region21: #{tpu_custom_call.1} parent=19 // pred_check
          %p166 = pneg %p74
        $region22: #{tpu_custom_call.1} parent=19 // pred_check_branch
          %168 = sbr.rel (%p166) target = $region24
        $region23: #{tpu_custom_call.1} parent=19 // pred_region
          %s169 = sand.u32 %s64, 1
          %s170 = scalar_lea.sflag [#allocation6], %s169
          %s171 = sand.u32 %s64, 1
          %s172 = smul.addr %s171, 32
          %s173 = scalar_lea.vmem [#allocation5], %s172
          %s175 = ssub.s32 512, 512
          %176 = vsyncadd %s170, %s175
          %s177 = smul.addr %s24, 128
          %s178 = scalar_lea.hbm %s1, %s177
          %s179 = sshll.u32 %s173, 4
          %s180 = int_to_ptr.vmem [resolvable:$true] %s179
          %185 = dma.hbm_to_vmem [thread:$0]  %s178, 512, %s180, %s170, 256, 128, 8
        $region24: #{tpu_custom_call.1} parent=19 // pred_fallthru
          _
        // Predicated region
        $region25: #{tpu_custom_call.1} parent=19 // pred_check
          %p186 = pneg %p100
        $region26: #{tpu_custom_call.1} parent=19 // pred_check_branch
          %188 = sbr.rel (%p186) target = $region28
        $region27: #{tpu_custom_call.1} parent=19 // pred_region
          %p189 = scmp.lt.s32.totalorder %s24, 1
          %s190 = scalar_select %p189, %s24, 1
          %s191 = scalar_lea.vmem %s2, %s190
        $region28: #{tpu_custom_call.1} parent=19 // pred_fallthru
          _
      $region20: #{tpu_custom_call.1} parent=5 // pred_fallthru
        _
      %p192 = scmp.le.s32.totalorder 1, %s16
      %p193 = scmp.lt.s32.totalorder %s16, 3
      %p194 = pnand %p192, %p193
      %p195 = pneg %p194
      // Predicated region
      $region29: #{tpu_custom_call.1} parent=5 // pred_check
        _
      $region30: #{tpu_custom_call.1} parent=5 // pred_check_branch
        %197 = sbr.rel (%p194) target = $region32
      $region31: #{tpu_custom_call.1} parent=5 // pred_region
        %s198 = ssub.s32 %s16, 1
        // Predicated region
        $region33: #{tpu_custom_call.1} parent=31 // pred_check
          %p199 = pneg %p54
        $region34: #{tpu_custom_call.1} parent=31 // pred_check_branch
          %201 = sbr.rel (%p199) target = $region36
        $region35: #{tpu_custom_call.1} parent=31 // pred_region
          %202 = dma.done [#allocation3], 64
        $region36: #{tpu_custom_call.1} parent=31 // pred_fallthru
          _
        %s203 = sand.u32 %s67, 1
        %s204 = scalar_lea.sflag [#allocation6], %s203
        %s205 = sand.u32 %s67, 1
        %s206 = smul.addr %s205, 32
        %s207 = scalar_lea.vmem [#allocation5], %s206
        // Predicated region
        $region37: #{tpu_custom_call.1} parent=31 // pred_check
          %p208 = pneg %p80
        $region38: #{tpu_custom_call.1} parent=31 // pred_check_branch
          %210 = sbr.rel (%p208) target = $region40
        $region39: #{tpu_custom_call.1} parent=31 // pred_region
          %211 = dma.done %s204, 512
        $region40: #{tpu_custom_call.1} parent=31 // pred_fallthru
          _
        %p212 = pneg %p54
        %p213 = pneg %p51
        %s214 = sand.u32 %s67, 1
        %s215 = scalar_lea.sflag [#allocation6], %s214
        %s216 = sand.u32 %s67, 1
        %s217 = smul.addr %s216, 32
        %s218 = scalar_lea.vmem [#allocation5], %s217
        %p219 = pneg %p80
        %p220 = pneg %p77
        %p221 = scmp.lt.s32.totalorder %s26, 1
        %s222 = scalar_select %p221, %s26, 1
        %s223 = scalar_lea.vmem %s2, %s222
        %p224 = pneg %p106
        %p225 = pneg %p103
        %p226 = pneg %p134
        %p227 = pneg %p131
        %s228 = sand.u32 %s121, 1
        %s229 = scalar_lea.sflag [#allocation4], %s228
        %s230 = sand.u32 %s121, 1
        %s231 = smul.addr %s230, 4
        %s232 = scalar_lea.vmem [#allocation7], %s231
        %p233 = scmp.lt.s32.totalorder %s26, 1
        %s234 = scalar_select %p233, %s26, 1
        %s235 = scalar_lea.vmem %s2, %s234
        %v236 = vld [vmem:[#allocation2] sm:$0xf]
        %v237 = vld [vmem:[%s207] sm:$0xff]
        %v238 = vld [vmem:[%s207 + $0x8] sm:$0xff]
        %v239 = vld [vmem:[%s207 + $0x10] sm:$0xff]
        %v240 = vld [vmem:[%s207 + $0x18] sm:$0xff]
        %v241 = vld [vmem:[%s235] sm:$0x1]
        %v243 = vlaneseq
        %v244 = vshrl.u32 %v243, 7
        %v245 = vsub.s32 0, %v244
        %v246 = vrot.slane %v241, %v245
        %vm248 = vcmask 261120
        %v250 = vsel %vm248, %v236, 0
        %252 = vmatprep.subr.mxu0 0.0
        %253 = vmatpush1.msra.mxu0 %v237
        %254 = vmatprep.subr.mxu0 0.0
        %255 = vmatpush1.msra.mxu0 %v238
        %256 = vmatprep.subr.mxu0 0.0
        %257 = vmatpush1.msra.mxu0 %v239
        %258 = vmatprep.subr.mxu0 0.0
        %259 = vmatpush1.msra.mxu0 %v240
        %260 = vmatprep.subr.mxu0 0.0
        %261 = vmatpush1.msra.mxu0 0.0
        %262 = vmatprep.subr.mxu0 0.0
        %263 = vmatpush1.msra.mxu0 0.0
        %264 = vmatprep.subr.mxu0 0.0
        %265 = vmatpush1.msra.mxu0 0.0
        %266 = vmatprep.subr.mxu0 0.0
        %267 = vmatpush1.msra.mxu0 0.0
        %268 = vmatprep.subr.mxu0 0.0
        %269 = vmatpush1.msra.mxu0 0.0
        %270 = vmatprep.subr.mxu0 0.0
        %271 = vmatpush1.msra.mxu0 0.0
        %272 = vmatprep.subr.mxu0 0.0
        %273 = vmatpush1.msra.mxu0 0.0
        %274 = vmatprep.subr.mxu0 0.0
        %275 = vmatpush1.msra.mxu0 0.0
        %276 = vmatprep.subr.mxu0 0.0
        %277 = vmatpush1.msra.mxu0 0.0
        %278 = vmatprep.subr.mxu0 0.0
        %279 = vmatpush1.msra.mxu0 0.0
        %280 = vmatprep.subr.mxu0 0.0
        %281 = vmatpush1.msra.mxu0 0.0
        %282 = vmatprep.subr.mxu0 0.0
        %283 = vmatpush1.msra.mxu0 0.0
        %284 = vmatprep.subr.mxu0 0.0
        %285 = vmatpush1.msra.mxu0 0.0
        %286 = vmatprep.subr.mxu0 0.0
        %287 = vmatpush1.msra.mxu0 0.0
        %288 = vmatprep.subr.mxu0 0.0
        %289 = vmatpush1.msra.mxu0 0.0
        %290 = vmatprep.subr.mxu0 0.0
        %291 = vmatpush1.msra.mxu0 0.0
        %292 = vmatprep.subr.mxu0 0.0
        %293 = vmatpush1.msra.mxu0 0.0
        %294 = vmatprep.subr.mxu0 0.0
        %295 = vmatpush1.msra.mxu0 0.0
        %296 = vmatprep.subr.mxu0 0.0
        %297 = vmatpush1.msra.mxu0 0.0
        %298 = vmatprep.subr.mxu0 0.0
        %299 = vmatpush1.msra.mxu0 0.0
        %300 = vmatprep.subr.mxu0 0.0
        %301 = vmatpush1.msra.mxu0 0.0
        %302 = vmatprep.subr.mxu0 0.0
        %303 = vmatpush1.msra.mxu0 0.0
        %304 = vmatprep.subr.mxu0 0.0
        %305 = vmatpush1.msra.mxu0 0.0
        %306 = vmatprep.subr.mxu0 0.0
        %307 = vmatpush1.msra.mxu0 0.0
        %308 = vmatprep.subr.mxu0 0.0
        %309 = vmatpush1.msra.mxu0 0.0
        %310 = vmatprep.subr.mxu0 0.0
        %311 = vmatpush1.msra.mxu0 0.0
        %312 = vmatprep.subr.mxu0 0.0
        %313 = vmatpush1.msra.mxu0 0.0
        %314 = vmatprep.subr.mxu0 0.0
        %315 = vmatpush1.msra.mxu0 0.0
        %316 = vmatprep.mubr.f32.mxu0 0.0
        %317 = vmatmul.mubr.f32.gmra.mrb[0].mxu0 %v250
        %v318 = vpop.f32.mrb[0].mxu0
        %v319 = vadd.f32 %v246, %v318
        %v320 = vpop.f32.mrb[0].mxu0
        %321 = vdwg.mxu0
        %322 = vst [vmem:[%s232] sm:$0xf] %v319
        %s323 = sand.u32 %s121, 1
        %s324 = scalar_lea.sflag [#allocation4], %s323
        %s325 = sand.u32 %s121, 1
        %s326 = smul.addr %s325, 4
        %s327 = scalar_lea.vmem [#allocation7], %s326
        // Predicated region
        $region41: #{tpu_custom_call.1} parent=31 // pred_check
          %p328 = pneg %p131
        $region42: #{tpu_custom_call.1} parent=31 // pred_check_branch
          %330 = sbr.rel (%p328) target = $region44
        $region43: #{tpu_custom_call.1} parent=31 // pred_region
          %s332 = ssub.s32 64, 64
          %333 = vsyncadd %s324, %s332
          %s334 = smul.addr %s25, 2
          %s335 = sadd.s32 %s26, %s334
          %s336 = smul.addr %s335, 64
          %s337 = scalar_lea.hbm %s3, %s336
          %s339 = sshll.u32 %s327, 4
          %s340 = int_to_ptr.vmem [resolvable:$true] %s339
          %342 = dma.vmem_to_hbm [thread:$0]  %s340, 64, %s337, %s324
        $region44: #{tpu_custom_call.1} parent=31 // pred_fallthru
          _
      $region32: #{tpu_custom_call.1} parent=5 // pred_fallthru
        _
      %p343 = scmp.le.s32.totalorder 2, %s16
      // Predicated region
      $region45: #{tpu_custom_call.1} parent=5 // pred_check
        %p344 = pneg %p343
      $region46: #{tpu_custom_call.1} parent=5 // pred_check_branch
        %346 = sbr.rel (%p344) target = $region48
      $region47: #{tpu_custom_call.1} parent=5 // pred_region
        %s347 = ssub.s32 %s16, 2
        // Predicated region
        $region49: #{tpu_custom_call.1} parent=47 // pred_check
          %p348 = pneg %p137
        $region50: #{tpu_custom_call.1} parent=47 // pred_check_branch
          %350 = sbr.rel (%p348) target = $region52
        $region51: #{tpu_custom_call.1} parent=47 // pred_region
          %s351 = sand.u32 %s122, 1
          %s352 = scalar_lea.sflag [#allocation4], %s351
          %s353 = sand.u32 %s122, 1
          %s354 = smul.addr %s353, 4
          %s355 = scalar_lea.vmem [#allocation7], %s354
          %356 = dma.done %s352, 64
        $region52: #{tpu_custom_call.1} parent=47 // pred_fallthru
          _
      $region48: #{tpu_custom_call.1} parent=5 // pred_fallthru
        _
    $region6: #{tpu_custom_call.1} parent=1 // loop_footer
      %s20 = sadd.s32 1, %s16
    $region7: #{tpu_custom_call.1} parent=1 // loop_footer_branch
      %15 = sbr.rel target = $region3
    $region8: #{tpu_custom_call.1} parent=1 // loop_exit
      _
    %357 = vsyncpa [#allocation3], 1
    %s358 = scalar_lea.sflag [#allocation3], 1
    %359 = vsyncpa %s358, 1
    %360 = vsyncpa [#allocation6], 1
    %s361 = scalar_lea.sflag [#allocation6], 1
    %362 = vsyncpa %s361, 1
    %363 = vsyncpa [#allocation4], 1
    %s364 = scalar_lea.sflag [#allocation4], 1
    %365 = vsyncpa %s364, 1

</llo_original>
